<compile_context>
chip_gen: v7x
topology: tpu7x:2x2x1
jax: 0.10.0
libtpu: 0.0.40
codegen_flags: <defaults>
</compile_context>

<pallas_src>
import jax
import jax.numpy as jnp
from jax import lax
from jax.experimental import pallas as pl
from jax.experimental.pallas import tpu as pltpu

VOCAB_SIZE = 100     # logical vocabulary of the synthetic encoder
HIDDEN = 32          # logical hidden size of the synthetic encoder
NUM_LABELS = 5       # logical number of labels

VOCAB_PAD = 128      # lane-dense padded vocab (one-hot / embedding rows)
HIDDEN_PAD = 128     # lane-dense padded hidden size
LABELS_PAD = 128     # lane-dense padded label (output) size

SUBLANE = 16         # bf16 sublane packing: keep batch tiles 16-row aligned
MAX_TILE = 1024      # batch tile cap (sweepable; VMEM use stays ~1 MiB)


def _round_up(x, m):
    return ((x + m - 1) // m) * m


def _choose_tile(batch):
    """Batch tile: 16-aligned, large (amortize ~0.35us/step), and whenever the
    batch permits, small enough that the grid has >= 2 steps so the "parallel"
    batch axis actually uses both TensorCores on v7x."""
    if batch <= SUBLANE:
        return SUBLANE
    tb = min(MAX_TILE, _round_up(batch, 2 * SUBLANE) // 2)
    return _round_up(tb, SUBLANE)


def _classifier_kernel(ids_ref, emb_ref, wp_ref, bp_ref, wc_ref, bc_ref, o_ref):
    """Fused: cls = one_hot(ids) @ Emb; pooled = tanh(cls @ Wp + bp);
    logits = pooled @ Wc + bc.

    * one-hot gather, pooler dense and classifier dense all run on the MXU with
      bf16 operands / f32 accumulation.
    * bias-add and tanh stay in f32 (VPU/EUP), output cast to bf16 at the end.
    """
    tb = ids_ref.shape[0]
    ids = ids_ref[...]                                             # [tb, 1] int32
    vocab = lax.broadcasted_iota(jnp.int32, (tb, VOCAB_PAD), 1)    # [tb, 128]
    onehot = (vocab == ids).astype(jnp.bfloat16)                   # exact 0/1

    # Embedding gather as an MXU matmul (rows copied exactly — one-hot).
    cls = jnp.dot(onehot, emb_ref[...],
                  preferred_element_type=jnp.float32)              # [tb, Hp] f32

    pooled = jnp.tanh(
        jnp.dot(cls.astype(jnp.bfloat16), wp_ref[...],
                preferred_element_type=jnp.float32)
        + bp_ref[...]                                              # [1, Hp] f32
    )

    logits = (
        jnp.dot(pooled.astype(jnp.bfloat16), wc_ref[...],
                preferred_element_type=jnp.float32)
        + bc_ref[...]                                              # [1, Lp] f32
    )
    o_ref[...] = logits.astype(o_ref.dtype)


def classifier_head(cls_ids, embedding, w_pool, b_pool, w_cls, b_cls, *, tb):
    """cls_ids: [Bp, 1] int32 (Bp multiple of tb) -> logits [Bp, LABELS_PAD] bf16."""
    Bp = cls_ids.shape[0]
    grid = (Bp // tb,)

    return pl.pallas_call(
        _classifier_kernel,
        out_shape=jax.ShapeDtypeStruct((Bp, LABELS_PAD), jnp.bfloat16),
        grid=grid,
        in_specs=[
            pl.BlockSpec((tb, 1), lambda i: (i, 0)),                   # CLS ids (tiled)
            pl.BlockSpec((VOCAB_PAD, HIDDEN_PAD), lambda i: (0, 0)),   # embedding (resident)
            pl.BlockSpec((HIDDEN_PAD, HIDDEN_PAD), lambda i: (0, 0)),  # pooler W (resident)
            pl.BlockSpec((1, HIDDEN_PAD), lambda i: (0, 0)),           # pooler b (resident)
            pl.BlockSpec((HIDDEN_PAD, LABELS_PAD), lambda i: (0, 0)),  # classifier W (resident)
            pl.BlockSpec((1, LABELS_PAD), lambda i: (0, 0)),           # classifier b (resident)
        ],
        out_specs=pl.BlockSpec((tb, LABELS_PAD), lambda i: (i, 0)),
        compiler_params=pltpu.CompilerParams(
            dimension_semantics=("parallel",),       # megacore sharding on v7x
        ),
    )(cls_ids, embedding, w_pool, b_pool, w_cls, b_cls)


def init_params(key):
    """Parameters stored zero-padded to lane-dense shapes.

    Logical values live in the leading [:VOCAB_SIZE]/[:HIDDEN]/[:NUM_LABELS]
    slices; zero padding is numerically inert through one-hot @ Emb, dot, tanh,
    dot.  Matmul weights are stored bf16 (MXU-native), biases stay f32.
    """
    k_emb, k_wp, k_bp, k_wc, k_bc = jax.random.split(key, 5)
    scale = 0.02

    def padded(k, logical_shape, padded_shape, dtype):
        w = scale * jax.random.normal(k, logical_shape, jnp.float32)
        out = jnp.zeros(padded_shape, jnp.float32)
        out = out.at[tuple(slice(0, s) for s in logical_shape)].set(w)
        return out.astype(dtype)

    return {
        "embedding": padded(k_emb, (VOCAB_SIZE, HIDDEN), (VOCAB_PAD, HIDDEN_PAD), jnp.bfloat16),
        "w_pool": padded(k_wp, (HIDDEN, HIDDEN), (HIDDEN_PAD, HIDDEN_PAD), jnp.bfloat16),
        "b_pool": padded(k_bp, (1, HIDDEN), (1, HIDDEN_PAD), jnp.float32),
        "w_cls": padded(k_wc, (HIDDEN, NUM_LABELS), (HIDDEN_PAD, LABELS_PAD), jnp.bfloat16),
        "b_cls": padded(k_bc, (1, NUM_LABELS), (1, LABELS_PAD), jnp.float32),
    }


@jax.jit
def classifier_forward(params, input_ids, attention_mask=None):
    """Mirrors Classifier.forward(input_ids, attention_mask) -> [B, num_labels] f32."""
    del attention_mask  # only affects the (unimplemented) attention layers
    B = input_ids.shape[0]

    tb = _choose_tile(B)
    Bp = _round_up(B, tb)

    # Only the CLS token ids cross into the kernel (4 B/row); pad the tiny id
    # vector (not a [B, 128] activation slab) to the tile boundary.
    cls_ids = input_ids[:, :1].astype(jnp.int32)               # [B, 1]
    if Bp != B:
        cls_ids = jnp.pad(cls_ids, ((0, Bp - B), (0, 0)))

    logits_pad = classifier_head(
        cls_ids,
        params["embedding"],
        params["w_pool"], params["b_pool"],
        params["w_cls"], params["b_cls"],
        tb=tb,
    )
    return logits_pad[:B, :NUM_LABELS].astype(jnp.float32)


if __name__ == "__main__":
    key = jax.random.PRNGKey(0)
    k_params, k_ids = jax.random.split(key)
    params = init_params(k_params)

    B, S = 2, 8
    input_ids = jax.random.randint(k_ids, (B, S), 0, VOCAB_SIZE, dtype=jnp.int32)
    attention_mask = jnp.ones((B, S), dtype=jnp.int32)

    logits = classifier_forward(params, input_ids, attention_mask)
    jax.block_until_ready(logits)

    assert logits.shape == (B, NUM_LABELS), logits.shape
    assert logits.dtype == jnp.float32

    # Pure-JAX reference of the fused head, using the logical (unpadded) slices
    # of the stored parameters in f32.  Tolerance is loosened for the bf16
    # matmul-operand / bf16-output path.
    emb = params["embedding"][:VOCAB_SIZE, :HIDDEN].astype(jnp.float32)
    w_pool = params["w_pool"][:HIDDEN, :HIDDEN].astype(jnp.float32)
    b_pool = params["b_pool"][:, :HIDDEN]
    w_cls = params["w_cls"][:HIDDEN, :NUM_LABELS].astype(jnp.float32)
    b_cls = params["b_cls"][:, :NUM_LABELS]

    cls_ref = jnp.take(emb, input_ids[:, 0], axis=0)           # [B, H]
    pooled_ref = jnp.tanh(cls_ref @ w_pool + b_pool)           # [B, H]
    logits_ref = pooled_ref @ w_cls + b_cls                    # [B, L]
    assert jnp.allclose(logits, logits_ref, atol=1e-2, rtol=1e-2), (
        float(jnp.max(jnp.abs(logits - logits_ref))))

    print("KERNEL_OK")
</pallas_src>

<mosaic_0001>
module attributes {stable_mosaic.version = 11 : i64} {
  func.func @_classifier_kernel(%arg0: i32, %arg1: memref<16x1xi32, #tpu.memory_space<vmem>>, %arg2: memref<128x128xbf16, #tpu.memory_space<vmem>>, %arg3: memref<128x128xbf16, #tpu.memory_space<vmem>>, %arg4: memref<1x128xf32, #tpu.memory_space<vmem>>, %arg5: memref<128x128xbf16, #tpu.memory_space<vmem>>, %arg6: memref<1x128xf32, #tpu.memory_space<vmem>>, %arg7: memref<16x128xbf16, #tpu.memory_space<vmem>>) attributes {dimension_semantics = [#tpu.dimension_semantics<parallel>], iteration_bounds = array<i64: 1>, scalar_prefetch = 0 : i64, scratch_operands = 0 : i64, tpu.core_type = #tpu.core_type<tc>, window_params = [{transform_indices = @transform_0, window_bounds = array<i64: 16, 1>}, {pipeline_mode = #tpu.pipeline_mode<synchronous>, transform_indices = @transform_1, window_bounds = array<i64: 128, 128>}, {pipeline_mode = #tpu.pipeline_mode<synchronous>, transform_indices = @transform_2, window_bounds = array<i64: 128, 128>}, {pipeline_mode = #tpu.pipeline_mode<synchronous>, transform_indices = @transform_3, window_bounds = array<i64: 1, 128>}, {pipeline_mode = #tpu.pipeline_mode<synchronous>, transform_indices = @transform_4, window_bounds = array<i64: 128, 128>}, {pipeline_mode = #tpu.pipeline_mode<synchronous>, transform_indices = @transform_5, window_bounds = array<i64: 1, 128>}, {transform_indices = @transform_6, window_bounds = array<i64: 16, 128>}]} {
    %c0 = arith.constant 0 : index
    %c0_0 = arith.constant 0 : index
    %0 = vector.load %arg1[%c0, %c0_0] : memref<16x1xi32, #tpu.memory_space<vmem>>, vector<16x1xi32>
    %1 = tpu.iota {dimensions = array<i32: 1>} : vector<16x128xi32>
    %2 = vector.broadcast %0 : vector<16x1xi32> to vector<16x128xi32>
    %3 = arith.cmpi eq, %1, %2 : vector<16x128xi32>
    %4 = arith.extui %3 : vector<16x128xi1> to vector<16x128xi32>
    %5 = arith.sitofp %4 : vector<16x128xi32> to vector<16x128xf32>
    %6 = arith.truncf %5 : vector<16x128xf32> to vector<16x128xbf16>
    %c0_1 = arith.constant 0 : index
    %c0_2 = arith.constant 0 : index
    %7 = vector.load %arg2[%c0_1, %c0_2] : memref<128x128xbf16, #tpu.memory_space<vmem>>, vector<128x128xbf16>
    %cst = arith.constant dense<0.000000e+00> : vector<16x128xf32>
    %8 = tpu.matmul %6, %7, %cst {dimension_numbers = #tpu.dot_dimension_numbers<[1], [0], [0], [1], [0, 0, 1, 1], [], []>} : vector<16x128xbf16>, vector<128x128xbf16>, vector<16x128xf32> -> vector<16x128xf32>
    %9 = arith.truncf %8 : vector<16x128xf32> to vector<16x128xbf16>
    %c0_3 = arith.constant 0 : index
    %c0_4 = arith.constant 0 : index
    %10 = vector.load %arg3[%c0_3, %c0_4] : memref<128x128xbf16, #tpu.memory_space<vmem>>, vector<128x128xbf16>
    %cst_5 = arith.constant dense<0.000000e+00> : vector<16x128xf32>
    %11 = tpu.matmul %9, %10, %cst_5 {dimension_numbers = #tpu.dot_dimension_numbers<[1], [0], [0], [1], [0, 0, 1, 1], [], []>} : vector<16x128xbf16>, vector<128x128xbf16>, vector<16x128xf32> -> vector<16x128xf32>
    %c0_6 = arith.constant 0 : index
    %c0_7 = arith.constant 0 : index
    %12 = vector.load %arg4[%c0_6, %c0_7] : memref<1x128xf32, #tpu.memory_space<vmem>>, vector<1x128xf32>
    %13 = vector.broadcast %12 : vector<1x128xf32> to vector<16x128xf32>
    %14 = arith.addf %11, %13 : vector<16x128xf32>
    %15 = math.tanh %14 : vector<16x128xf32>
    %16 = arith.truncf %15 : vector<16x128xf32> to vector<16x128xbf16>
    %c0_8 = arith.constant 0 : index
    %c0_9 = arith.constant 0 : index
    %17 = vector.load %arg5[%c0_8, %c0_9] : memref<128x128xbf16, #tpu.memory_space<vmem>>, vector<128x128xbf16>
    %cst_10 = arith.constant dense<0.000000e+00> : vector<16x128xf32>
    %18 = tpu.matmul %16, %17, %cst_10 {dimension_numbers = #tpu.dot_dimension_numbers<[1], [0], [0], [1], [0, 0, 1, 1], [], []>} : vector<16x128xbf16>, vector<128x128xbf16>, vector<16x128xf32> -> vector<16x128xf32>
    %c0_11 = arith.constant 0 : index
    %c0_12 = arith.constant 0 : index
    %19 = vector.load %arg6[%c0_11, %c0_12] : memref<1x128xf32, #tpu.memory_space<vmem>>, vector<1x128xf32>
    %20 = vector.broadcast %19 : vector<1x128xf32> to vector<16x128xf32>
    %21 = arith.addf %18, %20 : vector<16x128xf32>
    %22 = arith.truncf %21 : vector<16x128xf32> to vector<16x128xbf16>
    %c0_13 = arith.constant 0 : index
    %c0_14 = arith.constant 0 : index
    %23 = vector.load %arg7[%c0_13, %c0_14] : memref<16x128xbf16, #tpu.memory_space<vmem>>, vector<16x128xbf16>
    tpu.vector_store %arg7[%c0_13, %c0_14], %22 {strides = array<i32>} : memref<16x128xbf16, #tpu.memory_space<vmem>>, vector<16x128xbf16>,
    return
  }
  func.func @transform_0(%arg0: i32) -> (i32, i32) {
    %c0_i32 = arith.constant 0 : i32
    %c0_i32_0 = arith.constant 0 : i32
    return %arg0, %c0_i32 : i32, i32
  }
  func.func @transform_1(%arg0: i32) -> (i32, i32) {
    %c0_i32 = arith.constant 0 : i32
    %c0_i32_0 = arith.constant 0 : i32
    %c0_i32_1 = arith.constant 0 : i32
    return %c0_i32, %c0_i32_0 : i32, i32
  }
  func.func @transform_2(%arg0: i32) -> (i32, i32) {
    %c0_i32 = arith.constant 0 : i32
    %c0_i32_0 = arith.constant 0 : i32
    %c0_i32_1 = arith.constant 0 : i32
    return %c0_i32, %c0_i32_0 : i32, i32
  }
  func.func @transform_3(%arg0: i32) -> (i32, i32) {
    %c0_i32 = arith.constant 0 : i32
    %c0_i32_0 = arith.constant 0 : i32
    %c0_i32_1 = arith.constant 0 : i32
    return %c0_i32, %c0_i32_0 : i32, i32
  }
  func.func @transform_4(%arg0: i32) -> (i32, i32) {
    %c0_i32 = arith.constant 0 : i32
    %c0_i32_0 = arith.constant 0 : i32
    %c0_i32_1 = arith.constant 0 : i32
    return %c0_i32, %c0_i32_0 : i32, i32
  }
  func.func @transform_5(%arg0: i32) -> (i32, i32) {
    %c0_i32 = arith.constant 0 : i32
    %c0_i32_0 = arith.constant 0 : i32
    %c0_i32_1 = arith.constant 0 : i32
    return %c0_i32, %c0_i32_0 : i32, i32
  }
  func.func @transform_6(%arg0: i32) -> (i32, i32) {
    %c0_i32 = arith.constant 0 : i32
    %c0_i32_0 = arith.constant 0 : i32
    return %arg0, %c0_i32 : i32, i32
  }
}

</mosaic_0001>

<llo_original>
// kernel: classifier_forward.1
$region0: #{classifier_forward.1}
  #allocation0 [shape = 'u32[]', space=smem, size = 0x4, offset = 0x4, fixed_abs, tag = 'smem constant byte address 0x4 - core index']
  #allocation1 [shape = 'u32[144,128]{1,0:T(1,128)}', space=vmem, size = 0x12000, scoped, tag = 'internal scratch']
  %s0 = inlined_call_operand.vmem [shape: s32[16,1], index: 0, kind: input, shape index: {}]
  %s1 = inlined_call_operand.hbm [shape: bf16[128,128], index: 1, kind: input, shape index: {}]
  %s2 = inlined_call_operand.hbm [shape: bf16[128,128], index: 2, kind: input, shape index: {}]
  %s3 = inlined_call_operand.vmem [shape: f32[1,128], index: 3, kind: input, shape index: {}]
  %s4 = inlined_call_operand.hbm [shape: bf16[128,128], index: 4, kind: input, shape index: {}]
  %s5 = inlined_call_operand.vmem [shape: f32[1,128], index: 5, kind: input, shape index: {}]
  %s6 = inlined_call_operand.vmem [shape: bf16[16,128], index: 6, kind: output, shape index: {}]
  %s7 = sld [smem:[#allocation0]]
  $region46: #{classifier_forward.1} parent=0
    _
  %s9 = ssub.s32 1, %s7
  %s10 = scalar_select 0, %s9, %s7
  $region1: #{classifier_forward.1} parent=0
    #allocation2 [shape = 'u8[32768]{0}', space=vmem, size = 0x8000, scoped, tag = 'input window, operand 1, single buffered']
    #allocation3 [shape = 's32[1]{0}', space=sflag, size = 0x4, scoped, tag = 'scoped memory for classifier_forward.1']
    #allocation4 [shape = 'u8[32768]{0}', space=vmem, size = 0x8000, scoped, tag = 'input window, operand 2, single buffered']
    #allocation5 [shape = 's32[1]{0}', space=sflag, size = 0x4, scoped, tag = 'scoped memory for classifier_forward.1']
    #allocation6 [shape = 'u8[32768]{0}', space=vmem, size = 0x8000, scoped, tag = 'input window, operand 4, single buffered']
    %11 = vsyncpa [#allocation3], 0
    %12 = vsyncpa [#allocation5], 0
    // Predicated region
    $region2: #{classifier_forward.1} parent=1 // pred_check
      _
    $region3: #{classifier_forward.1} parent=1 // pred_check_branch
      %14 = sbr.rel (0) target = $region5
    $region4: #{classifier_forward.1} parent=1 // pred_region
      _
    $region5: #{classifier_forward.1} parent=1 // pred_fallthru
      _
    // Predicated region
    $region6: #{classifier_forward.1} parent=1 // pred_check
      _
    $region7: #{classifier_forward.1} parent=1 // pred_check_branch
      %16 = sbr.rel (0) target = $region9
    $region8: #{classifier_forward.1} parent=1 // pred_region
      %s18 = ssub.s32 1024, 1024
      %19 = vsyncadd [#allocation3], %s18
      %s20 = sshll.u32 [#allocation2], 4
      %s21 = int_to_ptr.vmem [resolvable:$true] %s20
      %26 = dma.hbm_to_vmem [thread:$0]  %s1, 1024, %s21, [#allocation3], 64, 64, 4
    $region9: #{classifier_forward.1} parent=1 // pred_fallthru
      _
    // Predicated region
    $region10: #{classifier_forward.1} parent=1 // pred_check
      _
    $region11: #{classifier_forward.1} parent=1 // pred_check_branch
      %28 = sbr.rel (0) target = $region13
    $region12: #{classifier_forward.1} parent=1 // pred_region
      %s30 = ssub.s32 1024, 1024
      %31 = vsyncadd [#allocation5], %s30
      %s32 = sshll.u32 [#allocation4], 4
      %s33 = int_to_ptr.vmem [resolvable:$true] %s32
      %38 = dma.hbm_to_vmem [thread:$0]  %s2, 1024, %s33, [#allocation5], 64, 64, 4
    $region13: #{classifier_forward.1} parent=1 // pred_fallthru
      _
    // Predicated region
    $region14: #{classifier_forward.1} parent=1 // pred_check
      _
    $region15: #{classifier_forward.1} parent=1 // pred_check_branch
      %40 = sbr.rel (0) target = $region17
    $region16: #{classifier_forward.1} parent=1 // pred_region
      _
    $region17: #{classifier_forward.1} parent=1 // pred_fallthru
      _
    // Predicated region
    $region18: #{classifier_forward.1} parent=1 // pred_check
      _
    $region19: #{classifier_forward.1} parent=1 // pred_check_branch
      %42 = sbr.rel (0) target = $region21
    $region20: #{classifier_forward.1} parent=1 // pred_region
      %s44 = ssub.s32 1024, 1024
      %45 = vsyncadd [#allocation5], %s44
      %s46 = sshll.u32 [#allocation6], 4
      %s47 = int_to_ptr.vmem [resolvable:$true] %s46
      %52 = dma.hbm_to_vmem [thread:$0]  %s4, 1024, %s47, [#allocation5], 64, 64, 4
    $region21: #{classifier_forward.1} parent=1 // pred_fallthru
      _
    // Predicated region
    $region22: #{classifier_forward.1} parent=1 // pred_check
      _
    $region23: #{classifier_forward.1} parent=1 // pred_check_branch
      %54 = sbr.rel (0) target = $region25
    $region24: #{classifier_forward.1} parent=1 // pred_region
      _
    $region25: #{classifier_forward.1} parent=1 // pred_fallthru
      _
    // Predicated region
    $region26: #{classifier_forward.1} parent=1 // pred_check
      _
    $region27: #{classifier_forward.1} parent=1 // pred_check_branch
      %56 = sbr.rel (0) target = $region29
    $region28: #{classifier_forward.1} parent=1 // pred_region
      %57 = dma.done [#allocation3], 1024
    $region29: #{classifier_forward.1} parent=1 // pred_fallthru
      _
    // Predicated region
    $region30: #{classifier_forward.1} parent=1 // pred_check
      _
    $region31: #{classifier_forward.1} parent=1 // pred_check_branch
      %59 = sbr.rel (0) target = $region33
    $region32: #{classifier_forward.1} parent=1 // pred_region
      %60 = dma.done [#allocation5], 1024
    $region33: #{classifier_forward.1} parent=1 // pred_fallthru
      _
    // Predicated region
    $region34: #{classifier_forward.1} parent=1 // pred_check
      _
    $region35: #{classifier_forward.1} parent=1 // pred_check_branch
      %62 = sbr.rel (0) target = $region37
    $region36: #{classifier_forward.1} parent=1 // pred_region
      %63 = dma.done [#allocation5], 1024
    $region37: #{classifier_forward.1} parent=1 // pred_fallthru
      _
    %v65 = vld [vmem:[%s0] sm:$0xff]
    %v66 = vld [vmem:[%s0 + $0x8] sm:$0xff]
    %v67 = vlaneseq
    %v68 = vand.u32 %v67, 127
    %69 = vset.pattern.permute.xlu0 0
    %70 = vperm.xlu0 %69, %v65
    %v71 = vpop.permute.xlu0 %70
    %72 = vset.pattern.permute.xlu0 0
    %73 = vperm.xlu0 %72, %v66
    %v74 = vpop.permute.xlu0 %73
    %vm75 = vcmp.eq.s32.totalorder %v68, %v71
    %vm76 = vcmp.eq.s32.totalorder %v68, %v74
    %v77 = vsel %vm75, 1, 0
    %v78 = vsel %vm76, 1, 0
    %v79 = vcvt.s32.f32 %v77
    %v80 = vcvt.s32.f32 %v78
    %v81 = vpack.c.bf16 %v80, %v79
    %v82 = vld [vmem:[#allocation2] sm:$0xf]
    %v83 = vld [vmem:[#allocation2 + $0x4] sm:$0xf]
    %v84 = vld [vmem:[#allocation2 + $0x8] sm:$0xf]
    %v85 = vld [vmem:[#allocation2 + $0xc] sm:$0xf]
    %v86 = vld [vmem:[#allocation2 + $0x10] sm:$0xf]
    %v87 = vld [vmem:[#allocation2 + $0x14] sm:$0xf]
    %v88 = vld [vmem:[#allocation2 + $0x18] sm:$0xf]
    %v89 = vld [vmem:[#allocation2 + $0x1c] sm:$0xf]
    %v90 = vld [vmem:[#allocation2 + $0x20] sm:$0xf]
    %v91 = vld [vmem:[#allocation2 + $0x24] sm:$0xf]
    %v92 = vld [vmem:[#allocation2 + $0x28] sm:$0xf]
    %v93 = vld [vmem:[#allocation2 + $0x2c] sm:$0xf]
    %v94 = vld [vmem:[#allocation2 + $0x30] sm:$0xf]
    %v95 = vld [vmem:[#allocation2 + $0x34] sm:$0xf]
    %v96 = vld [vmem:[#allocation2 + $0x38] sm:$0xf]
    %v97 = vld [vmem:[#allocation2 + $0x3c] sm:$0xf]
    %v114 = vunpack.c.l.b16 %v82
    %v115 = vunpack.c.l.b16 %v83
    %v116 = vunpack.c.l.b16 %v84
    %v117 = vunpack.c.l.b16 %v85
    %v118 = vunpack.c.l.b16 %v86
    %v119 = vunpack.c.l.b16 %v87
    %v120 = vunpack.c.l.b16 %v88
    %v121 = vunpack.c.l.b16 %v89
    %v122 = vunpack.c.l.b16 %v90
    %v123 = vunpack.c.l.b16 %v91
    %v124 = vunpack.c.l.b16 %v92
    %v125 = vunpack.c.l.b16 %v93
    %v126 = vunpack.c.l.b16 %v94
    %v127 = vunpack.c.l.b16 %v95
    %v128 = vunpack.c.l.b16 %v96
    %v129 = vunpack.c.l.b16 %v97
    %v130 = vpack.c.b16 %v115, %v114
    %v131 = vpack.c.b16 %v117, %v116
    %v132 = vpack.c.b16 %v119, %v118
    %v133 = vpack.c.b16 %v121, %v120
    %v134 = vpack.c.b16 %v123, %v122
    %v135 = vpack.c.b16 %v125, %v124
    %v136 = vpack.c.b16 %v127, %v126
    %v137 = vpack.c.b16 %v129, %v128
    %146 = vmatprep.subr.bf16.mxu0 0
    %147 = vmatpush1.bf16.msra.mxu0 %v130
    %148 = vmatprep.subr.bf16.mxu0 0
    %149 = vmatpush1.bf16.msra.mxu0 %v131
    %150 = vmatprep.subr.bf16.mxu0 0
    %151 = vmatpush1.bf16.msra.mxu0 %v132
    %152 = vmatprep.subr.bf16.mxu0 0
    %153 = vmatpush1.bf16.msra.mxu0 %v133
    %154 = vmatprep.subr.bf16.mxu0 0
    %155 = vmatpush1.bf16.msra.mxu0 %v134
    %156 = vmatprep.subr.bf16.mxu0 0
    %157 = vmatpush1.bf16.msra.mxu0 %v135
    %158 = vmatprep.subr.bf16.mxu0 0
    %159 = vmatpush1.bf16.msra.mxu0 %v136
    %160 = vmatprep.subr.bf16.mxu0 0
    %161 = vmatpush1.bf16.msra.mxu0 %v137
    %162 = vmatprep.subr.bf16.mxu0 0
    %163 = vmatpush1.bf16.msra.mxu0 0
    %164 = vmatprep.subr.bf16.mxu0 0
    %165 = vmatpush1.bf16.msra.mxu0 0
    %166 = vmatprep.subr.bf16.mxu0 0
    %167 = vmatpush1.bf16.msra.mxu0 0
    %168 = vmatprep.subr.bf16.mxu0 0
    %169 = vmatpush1.bf16.msra.mxu0 0
    %170 = vmatprep.subr.bf16.mxu0 0
    %171 = vmatpush1.bf16.msra.mxu0 0
    %172 = vmatprep.subr.bf16.mxu0 0
    %173 = vmatpush1.bf16.msra.mxu0 0
    %174 = vmatprep.subr.bf16.mxu0 0
    %175 = vmatpush1.bf16.msra.mxu0 0
    %176 = vmatprep.subr.bf16.mxu0 0
    %177 = vmatpush1.bf16.msra.mxu0 0
    %178 = vmatprep.mubr.bf16.mxu0 0
    %179 = vmatmul.mubr.bf16.gmra.mrb[0].mxu0 %v81
    %v180 = vpop.f32.mrb[0].mxu0
    %v181 = vadd.f32 0.0, %v180
    %v182 = vpop.f32.mrb[0].mxu0
    %v183 = vpop.f32.mrb[0].mxu0
    %v184 = vadd.f32 0.0, %v183
    %v185 = vpop.f32.mrb[0].mxu0
    %186 = vdwg.mxu0
    %v187 = vpack.c.bf16 %v184, %v181
    %v188 = vld [vmem:[#allocation4] sm:$0xf]
    %v189 = vld [vmem:[#allocation4 + $0x4] sm:$0xf]
    %v190 = vld [vmem:[#allocation4 + $0x8] sm:$0xf]
    %v191 = vld [vmem:[#allocation4 + $0xc] sm:$0xf]
    %v192 = vld [vmem:[#allocation4 + $0x10] sm:$0xf]
    %v193 = vld [vmem:[#allocation4 + $0x14] sm:$0xf]
    %v194 = vld [vmem:[#allocation4 + $0x18] sm:$0xf]
    %v195 = vld [vmem:[#allocation4 + $0x1c] sm:$0xf]
    %v196 = vld [vmem:[#allocation4 + $0x20] sm:$0xf]
    %v197 = vld [vmem:[#allocation4 + $0x24] sm:$0xf]
    %v198 = vld [vmem:[#allocation4 + $0x28] sm:$0xf]
    %v199 = vld [vmem:[#allocation4 + $0x2c] sm:$0xf]
    %v200 = vld [vmem:[#allocation4 + $0x30] sm:$0xf]
    %v201 = vld [vmem:[#allocation4 + $0x34] sm:$0xf]
    %v202 = vld [vmem:[#allocation4 + $0x38] sm:$0xf]
    %v203 = vld [vmem:[#allocation4 + $0x3c] sm:$0xf]
    %v204 = vld [vmem:[%s3] sm:$0x1]
    %v206 = vlaneseq
    %v207 = vshrl.u32 %v206, 7
    %v208 = vsub.s32 0, %v207
    %v209 = vrot.slane %v204, %v208
    %v227 = vunpack.c.l.b16 %v188
    %v228 = vunpack.c.l.b16 %v189
    %v229 = vunpack.c.l.b16 %v190
    %v230 = vunpack.c.l.b16 %v191
    %v231 = vunpack.c.l.b16 %v192
    %v232 = vunpack.c.l.b16 %v193
    %v233 = vunpack.c.l.b16 %v194
    %v234 = vunpack.c.l.b16 %v195
    %v235 = vunpack.c.l.b16 %v196
    %v236 = vunpack.c.l.b16 %v197
    %v237 = vunpack.c.l.b16 %v198
    %v238 = vunpack.c.l.b16 %v199
    %v239 = vunpack.c.l.b16 %v200
    %v240 = vunpack.c.l.b16 %v201
    %v241 = vunpack.c.l.b16 %v202
    %v242 = vunpack.c.l.b16 %v203
    %v243 = vpack.c.b16 %v228, %v227
    %v244 = vpack.c.b16 %v230, %v229
    %v245 = vpack.c.b16 %v232, %v231
    %v246 = vpack.c.b16 %v234, %v233
    %v247 = vpack.c.b16 %v236, %v235
    %v248 = vpack.c.b16 %v238, %v237
    %v249 = vpack.c.b16 %v240, %v239
    %v250 = vpack.c.b16 %v242, %v241
    %259 = vmatprep.subr.bf16.mxu0 0
    %260 = vmatpush1.bf16.msra.mxu0 %v243
    %261 = vmatprep.subr.bf16.mxu0 0
    %262 = vmatpush1.bf16.msra.mxu0 %v244
    %263 = vmatprep.subr.bf16.mxu0 0
    %264 = vmatpush1.bf16.msra.mxu0 %v245
    %265 = vmatprep.subr.bf16.mxu0 0
    %266 = vmatpush1.bf16.msra.mxu0 %v246
    %267 = vmatprep.subr.bf16.mxu0 0
    %268 = vmatpush1.bf16.msra.mxu0 %v247
    %269 = vmatprep.subr.bf16.mxu0 0
    %270 = vmatpush1.bf16.msra.mxu0 %v248
    %271 = vmatprep.subr.bf16.mxu0 0
    %272 = vmatpush1.bf16.msra.mxu0 %v249
    %273 = vmatprep.subr.bf16.mxu0 0
    %274 = vmatpush1.bf16.msra.mxu0 %v250
    %275 = vmatprep.subr.bf16.mxu0 0
    %276 = vmatpush1.bf16.msra.mxu0 0
    %277 = vmatprep.subr.bf16.mxu0 0
    %278 = vmatpush1.bf16.msra.mxu0 0
    %279 = vmatprep.subr.bf16.mxu0 0
    %280 = vmatpush1.bf16.msra.mxu0 0
    %281 = vmatprep.subr.bf16.mxu0 0
    %282 = vmatpush1.bf16.msra.mxu0 0
    %283 = vmatprep.subr.bf16.mxu0 0
    %284 = vmatpush1.bf16.msra.mxu0 0
    %285 = vmatprep.subr.bf16.mxu0 0
    %286 = vmatpush1.bf16.msra.mxu0 0
    %287 = vmatprep.subr.bf16.mxu0 0
    %288 = vmatpush1.bf16.msra.mxu0 0
    %289 = vmatprep.subr.bf16.mxu0 0
    %290 = vmatpush1.bf16.msra.mxu0 0
    %291 = vmatprep.mubr.bf16.mxu0 0
    %292 = vmatmul.mubr.bf16.gmra.mrb[0].mxu0 %v187
    %v293 = vpop.f32.mrb[0].mxu0
    %v294 = vadd.f32 %v209, %v293
    %v295 = vpop.f32.mrb[0].mxu0
    %v296 = vpop.f32.mrb[0].mxu0
    %v297 = vadd.f32 %v209, %v296
    %v298 = vpop.f32.mrb[0].mxu0
    %299 = vdwg.mxu0
    %v300 = vtanh.pop %v294
    %v301 = vtanh.pop %v297
    %v302 = vpack.c.bf16 %v301, %v300
    %v303 = vld [vmem:[#allocation6] sm:$0xf]
    %v304 = vld [vmem:[#allocation6 + $0x4] sm:$0xf]
    %v305 = vld [vmem:[#allocation6 + $0x8] sm:$0xf]
    %v306 = vld [vmem:[#allocation6 + $0xc] sm:$0xf]
    %v307 = vld [vmem:[#allocation6 + $0x10] sm:$0xf]
    %v308 = vld [vmem:[#allocation6 + $0x14] sm:$0xf]
    %v309 = vld [vmem:[#allocation6 + $0x18] sm:$0xf]
    %v310 = vld [vmem:[#allocation6 + $0x1c] sm:$0xf]
    %v311 = vld [vmem:[#allocation6 + $0x20] sm:$0xf]
    %v312 = vld [vmem:[#allocation6 + $0x24] sm:$0xf]
    %v313 = vld [vmem:[#allocation6 + $0x28] sm:$0xf]
    %v314 = vld [vmem:[#allocation6 + $0x2c] sm:$0xf]
    %v315 = vld [vmem:[#allocation6 + $0x30] sm:$0xf]
    %v316 = vld [vmem:[#allocation6 + $0x34] sm:$0xf]
    %v317 = vld [vmem:[#allocation6 + $0x38] sm:$0xf]
    %v318 = vld [vmem:[#allocation6 + $0x3c] sm:$0xf]
    %v319 = vld [vmem:[%s5] sm:$0x1]
    %v321 = vlaneseq
    %v322 = vshrl.u32 %v321, 7
    %v323 = vsub.s32 0, %v322
    %v324 = vrot.slane %v319, %v323
    %v342 = vunpack.c.l.b16 %v303
    %v343 = vunpack.c.l.b16 %v304
    %v344 = vunpack.c.l.b16 %v305
    %v345 = vunpack.c.l.b16 %v306
    %v346 = vunpack.c.l.b16 %v307
    %v347 = vunpack.c.l.b16 %v308
    %v348 = vunpack.c.l.b16 %v309
    %v349 = vunpack.c.l.b16 %v310
    %v350 = vunpack.c.l.b16 %v311
    %v351 = vunpack.c.l.b16 %v312
    %v352 = vunpack.c.l.b16 %v313
    %v353 = vunpack.c.l.b16 %v314
    %v354 = vunpack.c.l.b16 %v315
    %v355 = vunpack.c.l.b16 %v316
    %v356 = vunpack.c.l.b16 %v317
    %v357 = vunpack.c.l.b16 %v318
    %v358 = vpack.c.b16 %v343, %v342
    %v359 = vpack.c.b16 %v345, %v344
    %v360 = vpack.c.b16 %v347, %v346
    %v361 = vpack.c.b16 %v349, %v348
    %v362 = vpack.c.b16 %v351, %v350
    %v363 = vpack.c.b16 %v353, %v352
    %v364 = vpack.c.b16 %v355, %v354
    %v365 = vpack.c.b16 %v357, %v356
    %374 = vmatprep.subr.bf16.mxu0 0
    %375 = vmatpush1.bf16.msra.mxu0 %v358
    %376 = vmatprep.subr.bf16.mxu0 0
    %377 = vmatpush1.bf16.msra.mxu0 %v359
    %378 = vmatprep.subr.bf16.mxu0 0
    %379 = vmatpush1.bf16.msra.mxu0 %v360
    %380 = vmatprep.subr.bf16.mxu0 0
    %381 = vmatpush1.bf16.msra.mxu0 %v361
    %382 = vmatprep.subr.bf16.mxu0 0
    %383 = vmatpush1.bf16.msra.mxu0 %v362
    %384 = vmatprep.subr.bf16.mxu0 0
    %385 = vmatpush1.bf16.msra.mxu0 %v363
    %386 = vmatprep.subr.bf16.mxu0 0
    %387 = vmatpush1.bf16.msra.mxu0 %v364
    %388 = vmatprep.subr.bf16.mxu0 0
    %389 = vmatpush1.bf16.msra.mxu0 %v365
    %390 = vmatprep.subr.bf16.mxu0 0
    %391 = vmatpush1.bf16.msra.mxu0 0
    %392 = vmatprep.subr.bf16.mxu0 0
    %393 = vmatpush1.bf16.msra.mxu0 0
    %394 = vmatprep.subr.bf16.mxu0 0
    %395 = vmatpush1.bf16.msra.mxu0 0
    %396 = vmatprep.subr.bf16.mxu0 0
    %397 = vmatpush1.bf16.msra.mxu0 0
    %398 = vmatprep.subr.bf16.mxu0 0
    %399 = vmatpush1.bf16.msra.mxu0 0
    %400 = vmatprep.subr.bf16.mxu0 0
    %401 = vmatpush1.bf16.msra.mxu0 0
    %402 = vmatprep.subr.bf16.mxu0 0
    %403 = vmatpush1.bf16.msra.mxu0 0
    %404 = vmatprep.subr.bf16.mxu0 0
    %405 = vmatpush1.bf16.msra.mxu0 0
    %406 = vmatprep.mubr.bf16.mxu0 0
    %407 = vmatmul.mubr.bf16.gmra.mrb[0].mxu0 %v302
    %v408 = vpop.f32.mrb[0].mxu0
    %v409 = vadd.f32 %v324, %v408
    %v410 = vpop.f32.mrb[0].mxu0
    %v411 = vpop.f32.mrb[0].mxu0
    %v412 = vadd.f32 %v324, %v411
    %v413 = vpop.f32.mrb[0].mxu0
    %414 = vdwg.mxu0
    %v415 = vpack.c.bf16 %v412, %v409
    %v417 = vunpack.c.l.b16 %v415
    %v418 = vunpack.c.h.b16 %v415
    %v419 = vpack.c.b16 %v417, %v417
    %v420 = vpack.c.b16 %v418, %v418
    %423 = vst [vmem:[%s6] sm:$0xf] %v419
    %424 = vst [vmem:[%s6 + $0x4] sm:$0xf] %v420
    // Predicated region
    $region38: #{classifier_forward.1} parent=1 // pred_check
      _
    $region39: #{classifier_forward.1} parent=1 // pred_check_branch
      %426 = sbr.rel (0) target = $region41
    $region40: #{classifier_forward.1} parent=1 // pred_region
      _
    $region41: #{classifier_forward.1} parent=1 // pred_fallthru
      _
    // Predicated region
    $region42: #{classifier_forward.1} parent=1 // pred_check
      _
    $region43: #{classifier_forward.1} parent=1 // pred_check_branch
      %428 = sbr.rel (0) target = $region45
    $region44: #{classifier_forward.1} parent=1 // pred_region
      _
    $region45: #{classifier_forward.1} parent=1 // pred_fallthru
      _
    %429 = vsyncpa [#allocation3], 1
    %430 = vsyncpa [#allocation5], 1

</llo_original>
